<compile_context>
chip_gen: v5e
topology: v5e:2x2
jax: 0.10.0
libtpu: 0.0.40
codegen_flags: <defaults>
</compile_context>

<pallas_src>
from functools import partial
from typing import NamedTuple, Tuple

import jax
import jax.numpy as jnp
from jax.experimental import pallas as pl
from jax.experimental.pallas import tpu as pltpu

LANE = 128          # lane width: last-dim padding granularity
SUBLANE_BF16 = 16   # bf16 sublane packing: batch-tile granularity
VMEM_TARGET = 44 * 1024 * 1024   # stay well under v7x's 64 MiB per-TC VMEM


def _round_up(v, m):
    return ((v + m - 1) // m) * m


def mlp_kernel(x_ref, w1_ref, b1_ref, w2_ref, b2_ref, w3_ref, b3_ref, out_ref):
    """Fused 3-layer MLP on one batch tile (bf16 MXU inputs, f32 accumulation).

    x_ref:   (TILE_B, D0) bf16 activations (zero-padded features)
    wK_ref:  (D_{K-1}, D_K) bf16 per-layer padded weights (VMEM-resident)
    bK_ref:  (1, D_K) f32 per-layer padded biases
    out_ref: (TILE_B, D3) f32 (lane-dense; sliced to out_dim in the wrapper)
    """
    h = jnp.dot(x_ref[...], w1_ref[...], preferred_element_type=jnp.float32) + b1_ref[...]
    h = jnp.maximum(h, 0.0).astype(jnp.bfloat16)
    h = jnp.dot(h, w2_ref[...], preferred_element_type=jnp.float32) + b2_ref[...]
    h = jnp.maximum(h, 0.0).astype(jnp.bfloat16)
    # output layer: output_activation=None under the module's default args
    out_ref[...] = jnp.dot(h, w3_ref[...], preferred_element_type=jnp.float32) + b3_ref[...]


class PackedMLP(NamedTuple):
    weights: Tuple[jax.Array, jax.Array, jax.Array]   # per-layer padded, bf16
    biases: Tuple[jax.Array, jax.Array, jax.Array]    # per-layer padded, f32, shape (1, D)
    in_dim: int
    out_dim: int


def pack_params(params):
    """One-time prep: pad each layer's in/out dims independently to multiples of
    128 and cast weights to bf16. Call once, reuse across forward calls."""
    ws, bs = [], []
    for w, b in params:
        din, dout = w.shape
        Din, Dout = _round_up(din, LANE), _round_up(dout, LANE)
        ws.append(jnp.pad(w, ((0, Din - din), (0, Dout - dout))).astype(jnp.bfloat16))
        bs.append(jnp.pad(b.reshape(1, -1), ((0, 0), (0, Dout - dout))).astype(jnp.float32))
    return PackedMLP(tuple(ws), tuple(bs),
                     in_dim=params[0][0].shape[0], out_dim=params[-1][0].shape[1])


def _resident_spec(shape):
    """BlockSpec for grid-invariant (VMEM-resident) params: constant index_map,
    single-buffered (double-buffering a constant block is pure VMEM waste)."""
    index_map = lambda i: (0,) * len(shape)
    if hasattr(pl, "Buffered"):
        try:
            return pl.BlockSpec(shape, index_map, pipeline_mode=pl.Buffered(1))
        except TypeError:   # older jax without pipeline_mode: fall back to default
            pass
    return pl.BlockSpec(shape, index_map)


@partial(jax.jit, static_argnames=("out_dim", "max_tile_b"))
def _nn_forward_impl(x, w1, b1, w2, b2, w3, b3, *, out_dim, max_tile_b):
    B, in_dim = x.shape
    D0, D1 = w1.shape
    D2 = w2.shape[1]
    D3 = w3.shape[1]

    # ---- batch tiling, sized against a v7x-safe VMEM budget ------------------
    param_bytes = (w1.size + w2.size + w3.size) * 2 + (b1.size + b2.size + b3.size) * 4

    def act_bytes(t):
        return (2 * t * D0 * 2                 # x stream, double-buffered, bf16
                + 2 * t * D3 * 4               # out stream, double-buffered, f32
                + t * max(D1, D2, D3) * 6)     # live intermediate (f32 acc + bf16 copy)

    Bp = _round_up(max(B, SUBLANE_BF16), SUBLANE_BF16)
    tile_b = _round_up(min(max_tile_b, Bp), SUBLANE_BF16)
    while tile_b > SUBLANE_BF16 and param_bytes + act_bytes(tile_b) > VMEM_TARGET:
        tile_b = _round_up(tile_b // 2, SUBLANE_BF16)
    # TODO(synk): if param_bytes alone exceeds the budget (hidden >= ~1024-1536 on
    # v7x, ~2048 on v5e/v6e), switch to a K/N-tiled weight grid with an accumulator
    # instead of holding whole resident weights.

    # Pick the tile count first, then the smallest tile that covers Bp, so an
    # unlucky batch (e.g. 513) doesn't get rounded up by a whole extra tile.
    n_tiles = pl.cdiv(Bp, tile_b)
    tile_b = _round_up(pl.cdiv(Bp, n_tiles), SUBLANE_BF16)
    B_pad = n_tiles * tile_b

    # Pad + bf16-cast the activations in one fused pass (halves the input stream).
    x_pad = jnp.pad(x, ((0, B_pad - B), (0, D0 - in_dim))).astype(jnp.bfloat16)

    vmem_limit = int(min(max(param_bytes + act_bytes(tile_b) + (8 << 20), 16 << 20),
                         112 << 20))

    out_padded = pl.pallas_call(
        mlp_kernel,
        out_shape=jax.ShapeDtypeStruct((B_pad, D3), jnp.float32),
        grid=(n_tiles,),
        in_specs=[
            pl.BlockSpec((tile_b, D0), lambda i: (i, 0)),   # x: batch-tiled, pipelined
            _resident_spec((D0, D1)), _resident_spec((1, D1)),
            _resident_spec((D1, D2)), _resident_spec((1, D2)),
            _resident_spec((D2, D3)), _resident_spec((1, D3)),
        ],
        out_specs=pl.BlockSpec((tile_b, D3), lambda i: (i, 0)),
        compiler_params=pltpu.CompilerParams(
            dimension_semantics=("parallel",),   # megacore sharding of the batch axis
            vmem_limit_bytes=vmem_limit,
        ),
    )(x_pad, w1, b1, w2, b2, w3, b3)

    return out_padded[:B, :out_dim]


def nn_forward(x, packed: PackedMLP, *, max_tile_b=1024):
    """Forward pass of NN(input_dim, [h1, h2, out_dim]) with pre-packed params."""
    w1, w2, w3 = packed.weights
    b1, b2, b3 = packed.biases
    return _nn_forward_impl(x, w1, b1, w2, b2, w3, b3,
                            out_dim=packed.out_dim, max_tile_b=max_tile_b)


# ----------------------------- reference / init --------------------------------

def init_linear(key, fan_in, fan_out):
    """PyTorch default nn.Linear init: U(-1/sqrt(fan_in), 1/sqrt(fan_in))."""
    kw, kb = jax.random.split(key)
    bound = 1.0 / jnp.sqrt(jnp.float32(fan_in))
    # stored (in_features, out_features) so the kernel computes x @ W
    w = jax.random.uniform(kw, (fan_in, fan_out), jnp.float32, -bound, bound)
    b = jax.random.uniform(kb, (1, fan_out), jnp.float32, -bound, bound)
    return w, b


def build_params(key, input_dim, layers_info):
    """layers_info = [hidden1, hidden2, output_dim] as in the PyTorch module."""
    dims = [input_dim] + list(layers_info)
    keys = jax.random.split(key, len(dims) - 1)
    return [init_linear(k, dims[i], dims[i + 1]) for i, k in enumerate(keys)]


def nn_reference(x, params):
    """Pure-JAX f32 reference of the same forward pass."""
    (w1, b1), (w2, b2), (w3, b3) = params
    h = jnp.maximum(x @ w1 + b1, 0.0)
    h = jnp.maximum(h @ w2 + b2, 0.0)
    return h @ w3 + b3


if __name__ == "__main__":
    # Small shapes consistent with NN(input_dim=16, layers_info=[32, 32, 8])
    batch = 8
    input_dim = 16
    layers_info = [32, 32, 8]

    key = jax.random.PRNGKey(0)
    key_x, key_p = jax.random.split(key)
    x = jax.random.normal(key_x, (batch, input_dim), jnp.float32)
    params = build_params(key_p, input_dim, layers_info)

    packed = pack_params(params)      # one-time packing, reused for every forward
    out = nn_forward(x, packed)
    out = jax.block_until_ready(out)

    ref = nn_reference(x, params)
    assert out.shape == (batch, layers_info[-1]), f"bad shape {out.shape}"
    # Kernel runs the matmuls with bf16 inputs (f32 accumulation), so allow a
    # bf16-level tolerance against the pure-f32 reference.
    assert jnp.allclose(out, ref, atol=5e-2, rtol=5e-2), "mismatch vs JAX reference"

    # TODO(synk): embeddings / batch-norm / dropout / y_range branches are
    # disabled under the module's default constructor args and are not lowered.
    print("KERNEL_OK")
</pallas_src>

<mosaic_0001>
module attributes {stable_mosaic.version = 11 : i64} {
  func.func @mlp_kernel(%arg0: i32, %arg1: memref<16x128xbf16, #tpu.memory_space<vmem>>, %arg2: memref<128x128xbf16, #tpu.memory_space<vmem>>, %arg3: memref<1x128xf32, #tpu.memory_space<vmem>>, %arg4: memref<128x128xbf16, #tpu.memory_space<vmem>>, %arg5: memref<1x128xf32, #tpu.memory_space<vmem>>, %arg6: memref<128x128xbf16, #tpu.memory_space<vmem>>, %arg7: memref<1x128xf32, #tpu.memory_space<vmem>>, %arg8: memref<16x128xf32, #tpu.memory_space<vmem>>) attributes {dimension_semantics = [#tpu.dimension_semantics<parallel>], iteration_bounds = array<i64: 1>, scalar_prefetch = 0 : i64, scratch_operands = 0 : i64, tpu.core_type = #tpu.core_type<tc>, window_params = [{transform_indices = @transform_0, window_bounds = array<i64: 16, 128>}, {pipeline_mode = #tpu.pipeline_mode<synchronous>, transform_indices = @transform_1, window_bounds = array<i64: 128, 128>}, {pipeline_mode = #tpu.pipeline_mode<synchronous>, transform_indices = @transform_2, window_bounds = array<i64: 1, 128>}, {pipeline_mode = #tpu.pipeline_mode<synchronous>, transform_indices = @transform_3, window_bounds = array<i64: 128, 128>}, {pipeline_mode = #tpu.pipeline_mode<synchronous>, transform_indices = @transform_4, window_bounds = array<i64: 1, 128>}, {pipeline_mode = #tpu.pipeline_mode<synchronous>, transform_indices = @transform_5, window_bounds = array<i64: 128, 128>}, {pipeline_mode = #tpu.pipeline_mode<synchronous>, transform_indices = @transform_6, window_bounds = array<i64: 1, 128>}, {transform_indices = @transform_7, window_bounds = array<i64: 16, 128>}]} {
    %c0 = arith.constant 0 : index
    %c0_0 = arith.constant 0 : index
    %0 = vector.load %arg1[%c0, %c0_0] : memref<16x128xbf16, #tpu.memory_space<vmem>>, vector<16x128xbf16>
    %c0_1 = arith.constant 0 : index
    %c0_2 = arith.constant 0 : index
    %1 = vector.load %arg2[%c0_1, %c0_2] : memref<128x128xbf16, #tpu.memory_space<vmem>>, vector<128x128xbf16>
    %cst = arith.constant dense<0.000000e+00> : vector<16x128xf32>
    %2 = tpu.matmul %0, %1, %cst {dimension_numbers = #tpu.dot_dimension_numbers<[1], [0], [0], [1], [0, 0, 1, 1], [], []>} : vector<16x128xbf16>, vector<128x128xbf16>, vector<16x128xf32> -> vector<16x128xf32>
    %c0_3 = arith.constant 0 : index
    %c0_4 = arith.constant 0 : index
    %3 = vector.load %arg3[%c0_3, %c0_4] : memref<1x128xf32, #tpu.memory_space<vmem>>, vector<1x128xf32>
    %4 = vector.broadcast %3 : vector<1x128xf32> to vector<16x128xf32>
    %5 = arith.addf %2, %4 : vector<16x128xf32>
    %cst_5 = arith.constant 0.000000e+00 : f32
    %6 = vector.broadcast %cst_5 : f32 to vector<16x128xf32>
    %7 = arith.maximumf %5, %6 : vector<16x128xf32>
    %8 = arith.truncf %7 : vector<16x128xf32> to vector<16x128xbf16>
    %c0_6 = arith.constant 0 : index
    %c0_7 = arith.constant 0 : index
    %9 = vector.load %arg4[%c0_6, %c0_7] : memref<128x128xbf16, #tpu.memory_space<vmem>>, vector<128x128xbf16>
    %cst_8 = arith.constant dense<0.000000e+00> : vector<16x128xf32>
    %10 = tpu.matmul %8, %9, %cst_8 {dimension_numbers = #tpu.dot_dimension_numbers<[1], [0], [0], [1], [0, 0, 1, 1], [], []>} : vector<16x128xbf16>, vector<128x128xbf16>, vector<16x128xf32> -> vector<16x128xf32>
    %c0_9 = arith.constant 0 : index
    %c0_10 = arith.constant 0 : index
    %11 = vector.load %arg5[%c0_9, %c0_10] : memref<1x128xf32, #tpu.memory_space<vmem>>, vector<1x128xf32>
    %12 = vector.broadcast %11 : vector<1x128xf32> to vector<16x128xf32>
    %13 = arith.addf %10, %12 : vector<16x128xf32>
    %cst_11 = arith.constant 0.000000e+00 : f32
    %14 = vector.broadcast %cst_11 : f32 to vector<16x128xf32>
    %15 = arith.maximumf %13, %14 : vector<16x128xf32>
    %16 = arith.truncf %15 : vector<16x128xf32> to vector<16x128xbf16>
    %c0_12 = arith.constant 0 : index
    %c0_13 = arith.constant 0 : index
    %17 = vector.load %arg6[%c0_12, %c0_13] : memref<128x128xbf16, #tpu.memory_space<vmem>>, vector<128x128xbf16>
    %cst_14 = arith.constant dense<0.000000e+00> : vector<16x128xf32>
    %18 = tpu.matmul %16, %17, %cst_14 {dimension_numbers = #tpu.dot_dimension_numbers<[1], [0], [0], [1], [0, 0, 1, 1], [], []>} : vector<16x128xbf16>, vector<128x128xbf16>, vector<16x128xf32> -> vector<16x128xf32>
    %c0_15 = arith.constant 0 : index
    %c0_16 = arith.constant 0 : index
    %19 = vector.load %arg7[%c0_15, %c0_16] : memref<1x128xf32, #tpu.memory_space<vmem>>, vector<1x128xf32>
    %20 = vector.broadcast %19 : vector<1x128xf32> to vector<16x128xf32>
    %21 = arith.addf %18, %20 : vector<16x128xf32>
    %c0_17 = arith.constant 0 : index
    %c0_18 = arith.constant 0 : index
    %22 = vector.load %arg8[%c0_17, %c0_18] : memref<16x128xf32, #tpu.memory_space<vmem>>, vector<16x128xf32>
    tpu.vector_store %arg8[%c0_17, %c0_18], %21 {strides = array<i32>} : memref<16x128xf32, #tpu.memory_space<vmem>>, vector<16x128xf32>,
    return
  }
  func.func @transform_0(%arg0: i32) -> (i32, i32) {
    %c0_i32 = arith.constant 0 : i32
    %c0_i32_0 = arith.constant 0 : i32
    return %arg0, %c0_i32 : i32, i32
  }
  func.func @transform_1(%arg0: i32) -> (i32, i32) {
    %c0_i32 = arith.constant 0 : i32
    %c0_i32_0 = arith.constant 0 : i32
    %c0_i32_1 = arith.constant 0 : i32
    return %c0_i32, %c0_i32_0 : i32, i32
  }
  func.func @transform_2(%arg0: i32) -> (i32, i32) {
    %c0_i32 = arith.constant 0 : i32
    %c0_i32_0 = arith.constant 0 : i32
    %c0_i32_1 = arith.constant 0 : i32
    return %c0_i32, %c0_i32_0 : i32, i32
  }
  func.func @transform_3(%arg0: i32) -> (i32, i32) {
    %c0_i32 = arith.constant 0 : i32
    %c0_i32_0 = arith.constant 0 : i32
    %c0_i32_1 = arith.constant 0 : i32
    return %c0_i32, %c0_i32_0 : i32, i32
  }
  func.func @transform_4(%arg0: i32) -> (i32, i32) {
    %c0_i32 = arith.constant 0 : i32
    %c0_i32_0 = arith.constant 0 : i32
    %c0_i32_1 = arith.constant 0 : i32
    return %c0_i32, %c0_i32_0 : i32, i32
  }
  func.func @transform_5(%arg0: i32) -> (i32, i32) {
    %c0_i32 = arith.constant 0 : i32
    %c0_i32_0 = arith.constant 0 : i32
    %c0_i32_1 = arith.constant 0 : i32
    return %c0_i32, %c0_i32_0 : i32, i32
  }
  func.func @transform_6(%arg0: i32) -> (i32, i32) {
    %c0_i32 = arith.constant 0 : i32
    %c0_i32_0 = arith.constant 0 : i32
    %c0_i32_1 = arith.constant 0 : i32
    return %c0_i32, %c0_i32_0 : i32, i32
  }
  func.func @transform_7(%arg0: i32) -> (i32, i32) {
    %c0_i32 = arith.constant 0 : i32
    %c0_i32_0 = arith.constant 0 : i32
    return %arg0, %c0_i32 : i32, i32
  }
}

</mosaic_0001>

<llo_original>
// kernel: _nn_forward_impl.1
$region0: #{_nn_forward_impl.1}
  #allocation0 [shape = 'u32[]', space=smem, size = 0x4, offset = 0x4, fixed_abs, tag = 'smem constant byte address 0x4 - core index']
  #allocation1 [shape = 'u32[72,128]{1,0:T(1,128)}', space=vmem, size = 0x9000, scoped, tag = 'internal scratch']
  %s0 = inlined_call_operand.vmem [shape: bf16[16,128], index: 0, kind: input, shape index: {}]
  %s1 = inlined_call_operand.hbm [shape: bf16[128,128], index: 1, kind: input, shape index: {}]
  %s2 = inlined_call_operand.vmem [shape: f32[1,128], index: 2, kind: input, shape index: {}]
  %s3 = inlined_call_operand.hbm [shape: bf16[128,128], index: 3, kind: input, shape index: {}]
  %s4 = inlined_call_operand.vmem [shape: f32[1,128], index: 4, kind: input, shape index: {}]
  %s5 = inlined_call_operand.hbm [shape: bf16[128,128], index: 5, kind: input, shape index: {}]
  %s6 = inlined_call_operand.vmem [shape: f32[1,128], index: 6, kind: input, shape index: {}]
  %s7 = inlined_call_operand.vmem [shape: f32[16,128], index: 7, kind: output, shape index: {}]
  %s8 = sld [smem:[#allocation0]]
  $region50: #{_nn_forward_impl.1} parent=0
    _
  %s10 = ssub.s32 1, %s8
  %s11 = scalar_select 0, %s10, %s8
  $region1: #{_nn_forward_impl.1} parent=0
    #allocation2 [shape = 'u8[32768]{0}', space=vmem, size = 0x8000, scoped, tag = 'input window, operand 1, single buffered']
    #allocation3 [shape = 's32[1]{0}', space=sflag, size = 0x4, scoped, tag = 'scoped memory for _nn_forward_impl.1']
    #allocation4 [shape = 'u8[32768]{0}', space=vmem, size = 0x8000, scoped, tag = 'input window, operand 3, single buffered']
    #allocation5 [shape = 's32[1]{0}', space=sflag, size = 0x4, scoped, tag = 'scoped memory for _nn_forward_impl.1']
    #allocation6 [shape = 'u8[32768]{0}', space=vmem, size = 0x8000, scoped, tag = 'input window, operand 5, single buffered']
    %12 = vsyncpa [#allocation3], 0
    %13 = vsyncpa [#allocation5], 0
    // Predicated region
    $region2: #{_nn_forward_impl.1} parent=1 // pred_check
      _
    $region3: #{_nn_forward_impl.1} parent=1 // pred_check_branch
      %15 = sbr.rel (0) target = $region5
    $region4: #{_nn_forward_impl.1} parent=1 // pred_region
      _
    $region5: #{_nn_forward_impl.1} parent=1 // pred_fallthru
      _
    // Predicated region
    $region6: #{_nn_forward_impl.1} parent=1 // pred_check
      _
    $region7: #{_nn_forward_impl.1} parent=1 // pred_check_branch
      %17 = sbr.rel (0) target = $region9
    $region8: #{_nn_forward_impl.1} parent=1 // pred_region
      %19 = vsyncadd [#allocation3], 0
      %s20 = sshll.u32 %s1, 4
      %s21 = int_to_ptr.hbm [resolvable:$true] %s20
      %s22 = sshll.u32 [#allocation2], 4
      %s23 = int_to_ptr.vmem [resolvable:$true] %s22
      %28 = dma.hbm_to_vmem [thread:$0]  %s21, 1024, %s23, [#allocation3], 64, 64, 4
    $region9: #{_nn_forward_impl.1} parent=1 // pred_fallthru
      _
    // Predicated region
    $region10: #{_nn_forward_impl.1} parent=1 // pred_check
      _
    $region11: #{_nn_forward_impl.1} parent=1 // pred_check_branch
      %30 = sbr.rel (0) target = $region13
    $region12: #{_nn_forward_impl.1} parent=1 // pred_region
      _
    $region13: #{_nn_forward_impl.1} parent=1 // pred_fallthru
      _
    // Predicated region
    $region14: #{_nn_forward_impl.1} parent=1 // pred_check
      _
    $region15: #{_nn_forward_impl.1} parent=1 // pred_check_branch
      %32 = sbr.rel (0) target = $region17
    $region16: #{_nn_forward_impl.1} parent=1 // pred_region
      %34 = vsyncadd [#allocation5], 0
      %s35 = sshll.u32 %s3, 4
      %s36 = int_to_ptr.hbm [resolvable:$true] %s35
      %s37 = sshll.u32 [#allocation4], 4
      %s38 = int_to_ptr.vmem [resolvable:$true] %s37
      %43 = dma.hbm_to_vmem [thread:$0]  %s36, 1024, %s38, [#allocation5], 64, 64, 4
    $region17: #{_nn_forward_impl.1} parent=1 // pred_fallthru
      _
    // Predicated region
    $region18: #{_nn_forward_impl.1} parent=1 // pred_check
      _
    $region19: #{_nn_forward_impl.1} parent=1 // pred_check_branch
      %45 = sbr.rel (0) target = $region21
    $region20: #{_nn_forward_impl.1} parent=1 // pred_region
      _
    $region21: #{_nn_forward_impl.1} parent=1 // pred_fallthru
      _
    // Predicated region
    $region22: #{_nn_forward_impl.1} parent=1 // pred_check
      _
    $region23: #{_nn_forward_impl.1} parent=1 // pred_check_branch
      %47 = sbr.rel (0) target = $region25
    $region24: #{_nn_forward_impl.1} parent=1 // pred_region
      %49 = vsyncadd [#allocation5], 0
      %s50 = sshll.u32 %s5, 4
      %s51 = int_to_ptr.hbm [resolvable:$true] %s50
      %s52 = sshll.u32 [#allocation6], 4
      %s53 = int_to_ptr.vmem [resolvable:$true] %s52
      %58 = dma.hbm_to_vmem [thread:$0]  %s51, 1024, %s53, [#allocation5], 64, 64, 4
    $region25: #{_nn_forward_impl.1} parent=1 // pred_fallthru
      _
    // Predicated region
    $region26: #{_nn_forward_impl.1} parent=1 // pred_check
      _
    $region27: #{_nn_forward_impl.1} parent=1 // pred_check_branch
      %60 = sbr.rel (0) target = $region29
    $region28: #{_nn_forward_impl.1} parent=1 // pred_region
      _
    $region29: #{_nn_forward_impl.1} parent=1 // pred_fallthru
      _
    // Predicated region
    $region30: #{_nn_forward_impl.1} parent=1 // pred_check
      _
    $region31: #{_nn_forward_impl.1} parent=1 // pred_check_branch
      %62 = sbr.rel (0) target = $region33
    $region32: #{_nn_forward_impl.1} parent=1 // pred_region
      %64 = dma.done [#allocation3], 1024
    $region33: #{_nn_forward_impl.1} parent=1 // pred_fallthru
      _
    // Predicated region
    $region34: #{_nn_forward_impl.1} parent=1 // pred_check
      _
    $region35: #{_nn_forward_impl.1} parent=1 // pred_check_branch
      %66 = sbr.rel (0) target = $region37
    $region36: #{_nn_forward_impl.1} parent=1 // pred_region
      %68 = dma.done [#allocation5], 1024
    $region37: #{_nn_forward_impl.1} parent=1 // pred_fallthru
      _
    // Predicated region
    $region38: #{_nn_forward_impl.1} parent=1 // pred_check
      _
    $region39: #{_nn_forward_impl.1} parent=1 // pred_check_branch
      %70 = sbr.rel (0) target = $region41
    $region40: #{_nn_forward_impl.1} parent=1 // pred_region
      %72 = dma.done [#allocation5], 1024
    $region41: #{_nn_forward_impl.1} parent=1 // pred_fallthru
      _
    %v73 = vld [vmem:[%s0] sm:$0xf]
    %v74 = vld [vmem:[%s0 + $0x4] sm:$0xf]
    %v75 = vld [vmem:[#allocation2] sm:$0xf]
    %v76 = vld [vmem:[#allocation2 + $0x4] sm:$0xf]
    %v77 = vld [vmem:[#allocation2 + $0x8] sm:$0xf]
    %v78 = vld [vmem:[#allocation2 + $0xc] sm:$0xf]
    %v79 = vld [vmem:[#allocation2 + $0x10] sm:$0xf]
    %v80 = vld [vmem:[#allocation2 + $0x14] sm:$0xf]
    %v81 = vld [vmem:[#allocation2 + $0x18] sm:$0xf]
    %v82 = vld [vmem:[#allocation2 + $0x1c] sm:$0xf]
    %v83 = vld [vmem:[#allocation2 + $0x20] sm:$0xf]
    %v84 = vld [vmem:[#allocation2 + $0x24] sm:$0xf]
    %v85 = vld [vmem:[#allocation2 + $0x28] sm:$0xf]
    %v86 = vld [vmem:[#allocation2 + $0x2c] sm:$0xf]
    %v87 = vld [vmem:[#allocation2 + $0x30] sm:$0xf]
    %v88 = vld [vmem:[#allocation2 + $0x34] sm:$0xf]
    %v89 = vld [vmem:[#allocation2 + $0x38] sm:$0xf]
    %v90 = vld [vmem:[#allocation2 + $0x3c] sm:$0xf]
    %v91 = vld [vmem:[%s2] sm:$0x1]
    %v93 = vperm.slane %v91, 0
    %v97 = vunpack.c.l.b16 %v73
    %v98 = vunpack.c.l.b16 %v74
    %v99 = vpack.c.b16 %v98, %v97
    %v117 = vunpack.c.l.b16 %v75
    %v118 = vunpack.c.l.b16 %v76
    %v119 = vunpack.c.l.b16 %v77
    %v120 = vunpack.c.l.b16 %v78
    %v121 = vunpack.c.l.b16 %v79
    %v122 = vunpack.c.l.b16 %v80
    %v123 = vunpack.c.l.b16 %v81
    %v124 = vunpack.c.l.b16 %v82
    %v125 = vunpack.c.l.b16 %v83
    %v126 = vunpack.c.l.b16 %v84
    %v127 = vunpack.c.l.b16 %v85
    %v128 = vunpack.c.l.b16 %v86
    %v129 = vunpack.c.l.b16 %v87
    %v130 = vunpack.c.l.b16 %v88
    %v131 = vunpack.c.l.b16 %v89
    %v132 = vunpack.c.l.b16 %v90
    %v133 = vpack.c.b16 %v118, %v117
    %v134 = vpack.c.b16 %v120, %v119
    %v135 = vpack.c.b16 %v122, %v121
    %v136 = vpack.c.b16 %v124, %v123
    %v137 = vpack.c.b16 %v126, %v125
    %v138 = vpack.c.b16 %v128, %v127
    %v139 = vpack.c.b16 %v130, %v129
    %v140 = vpack.c.b16 %v132, %v131
    %149 = vmatpush.bf16.msra.mxu0 %v140
    %150 = vmatpush.bf16.msra.mxu0 %v139
    %151 = vmatpush.bf16.msra.mxu0 %v138
    %152 = vmatpush.bf16.msra.mxu0 %v137
    %153 = vmatpush.bf16.msra.mxu0 %v136
    %154 = vmatpush.bf16.msra.mxu0 %v135
    %155 = vmatpush.bf16.msra.mxu0 %v134
    %156 = vmatpush.bf16.msra.mxu0 %v133
    %157 = vmatmul.bf16.gmra.mxu0 %v99
    %v158 = vpop.f32.mrf.mxu0
    %v159 = vadd.f32 %v93, %v158
    %v160 = vpop.f32.mrf.mxu0
    %v161 = vadd.f32 %v93, %v160
    %162 = vdwg.mxu0
    %v163 = vmax.f32 %v159, 0.0
    %v164 = vmax.f32 %v161, 0.0
    %v165 = vpack.c.bf16 %v164, %v163
    %v166 = vld [vmem:[#allocation4] sm:$0xf]
    %v167 = vld [vmem:[#allocation4 + $0x4] sm:$0xf]
    %v168 = vld [vmem:[#allocation4 + $0x8] sm:$0xf]
    %v169 = vld [vmem:[#allocation4 + $0xc] sm:$0xf]
    %v170 = vld [vmem:[#allocation4 + $0x10] sm:$0xf]
    %v171 = vld [vmem:[#allocation4 + $0x14] sm:$0xf]
    %v172 = vld [vmem:[#allocation4 + $0x18] sm:$0xf]
    %v173 = vld [vmem:[#allocation4 + $0x1c] sm:$0xf]
    %v174 = vld [vmem:[#allocation4 + $0x20] sm:$0xf]
    %v175 = vld [vmem:[#allocation4 + $0x24] sm:$0xf]
    %v176 = vld [vmem:[#allocation4 + $0x28] sm:$0xf]
    %v177 = vld [vmem:[#allocation4 + $0x2c] sm:$0xf]
    %v178 = vld [vmem:[#allocation4 + $0x30] sm:$0xf]
    %v179 = vld [vmem:[#allocation4 + $0x34] sm:$0xf]
    %v180 = vld [vmem:[#allocation4 + $0x38] sm:$0xf]
    %v181 = vld [vmem:[#allocation4 + $0x3c] sm:$0xf]
    %v182 = vld [vmem:[%s4] sm:$0x1]
    %v184 = vperm.slane %v182, 0
    %v202 = vunpack.c.l.b16 %v166
    %v203 = vunpack.c.l.b16 %v167
    %v204 = vunpack.c.l.b16 %v168
    %v205 = vunpack.c.l.b16 %v169
    %v206 = vunpack.c.l.b16 %v170
    %v207 = vunpack.c.l.b16 %v171
    %v208 = vunpack.c.l.b16 %v172
    %v209 = vunpack.c.l.b16 %v173
    %v210 = vunpack.c.l.b16 %v174
    %v211 = vunpack.c.l.b16 %v175
    %v212 = vunpack.c.l.b16 %v176
    %v213 = vunpack.c.l.b16 %v177
    %v214 = vunpack.c.l.b16 %v178
    %v215 = vunpack.c.l.b16 %v179
    %v216 = vunpack.c.l.b16 %v180
    %v217 = vunpack.c.l.b16 %v181
    %v218 = vpack.c.b16 %v203, %v202
    %v219 = vpack.c.b16 %v205, %v204
    %v220 = vpack.c.b16 %v207, %v206
    %v221 = vpack.c.b16 %v209, %v208
    %v222 = vpack.c.b16 %v211, %v210
    %v223 = vpack.c.b16 %v213, %v212
    %v224 = vpack.c.b16 %v215, %v214
    %v225 = vpack.c.b16 %v217, %v216
    %234 = vmatpush.bf16.msra.mxu0 %v225
    %235 = vmatpush.bf16.msra.mxu0 %v224
    %236 = vmatpush.bf16.msra.mxu0 %v223
    %237 = vmatpush.bf16.msra.mxu0 %v222
    %238 = vmatpush.bf16.msra.mxu0 %v221
    %239 = vmatpush.bf16.msra.mxu0 %v220
    %240 = vmatpush.bf16.msra.mxu0 %v219
    %241 = vmatpush.bf16.msra.mxu0 %v218
    %242 = vmatmul.bf16.gmra.mxu0 %v165
    %v243 = vpop.f32.mrf.mxu0
    %v244 = vadd.f32 %v184, %v243
    %v245 = vpop.f32.mrf.mxu0
    %v246 = vadd.f32 %v184, %v245
    %247 = vdwg.mxu0
    %v248 = vmax.f32 %v244, 0.0
    %v249 = vmax.f32 %v246, 0.0
    %v250 = vpack.c.bf16 %v249, %v248
    %v251 = vld [vmem:[#allocation6] sm:$0xf]
    %v252 = vld [vmem:[#allocation6 + $0x4] sm:$0xf]
    %v253 = vld [vmem:[#allocation6 + $0x8] sm:$0xf]
    %v254 = vld [vmem:[#allocation6 + $0xc] sm:$0xf]
    %v255 = vld [vmem:[#allocation6 + $0x10] sm:$0xf]
    %v256 = vld [vmem:[#allocation6 + $0x14] sm:$0xf]
    %v257 = vld [vmem:[#allocation6 + $0x18] sm:$0xf]
    %v258 = vld [vmem:[#allocation6 + $0x1c] sm:$0xf]
    %v259 = vld [vmem:[#allocation6 + $0x20] sm:$0xf]
    %v260 = vld [vmem:[#allocation6 + $0x24] sm:$0xf]
    %v261 = vld [vmem:[#allocation6 + $0x28] sm:$0xf]
    %v262 = vld [vmem:[#allocation6 + $0x2c] sm:$0xf]
    %v263 = vld [vmem:[#allocation6 + $0x30] sm:$0xf]
    %v264 = vld [vmem:[#allocation6 + $0x34] sm:$0xf]
    %v265 = vld [vmem:[#allocation6 + $0x38] sm:$0xf]
    %v266 = vld [vmem:[#allocation6 + $0x3c] sm:$0xf]
    %v267 = vld [vmem:[%s6] sm:$0x1]
    %v269 = vperm.slane %v267, 0
    %v287 = vunpack.c.l.b16 %v251
    %v288 = vunpack.c.l.b16 %v252
    %v289 = vunpack.c.l.b16 %v253
    %v290 = vunpack.c.l.b16 %v254
    %v291 = vunpack.c.l.b16 %v255
    %v292 = vunpack.c.l.b16 %v256
    %v293 = vunpack.c.l.b16 %v257
    %v294 = vunpack.c.l.b16 %v258
    %v295 = vunpack.c.l.b16 %v259
    %v296 = vunpack.c.l.b16 %v260
    %v297 = vunpack.c.l.b16 %v261
    %v298 = vunpack.c.l.b16 %v262
    %v299 = vunpack.c.l.b16 %v263
    %v300 = vunpack.c.l.b16 %v264
    %v301 = vunpack.c.l.b16 %v265
    %v302 = vunpack.c.l.b16 %v266
    %v303 = vpack.c.b16 %v288, %v287
    %v304 = vpack.c.b16 %v290, %v289
    %v305 = vpack.c.b16 %v292, %v291
    %v306 = vpack.c.b16 %v294, %v293
    %v307 = vpack.c.b16 %v296, %v295
    %v308 = vpack.c.b16 %v298, %v297
    %v309 = vpack.c.b16 %v300, %v299
    %v310 = vpack.c.b16 %v302, %v301
    %319 = vmatpush.bf16.msra.mxu0 %v310
    %320 = vmatpush.bf16.msra.mxu0 %v309
    %321 = vmatpush.bf16.msra.mxu0 %v308
    %322 = vmatpush.bf16.msra.mxu0 %v307
    %323 = vmatpush.bf16.msra.mxu0 %v306
    %324 = vmatpush.bf16.msra.mxu0 %v305
    %325 = vmatpush.bf16.msra.mxu0 %v304
    %326 = vmatpush.bf16.msra.mxu0 %v303
    %327 = vmatmul.bf16.gmra.mxu0 %v250
    %v328 = vpop.f32.mrf.mxu0
    %v329 = vadd.f32 %v269, %v328
    %v330 = vpop.f32.mrf.mxu0
    %v331 = vadd.f32 %v269, %v330
    %332 = vdwg.mxu0
    %333 = vst [vmem:[%s7] sm:$0xff] %v329
    %334 = vst [vmem:[%s7 + $0x8] sm:$0xff] %v331
    // Predicated region
    $region42: #{_nn_forward_impl.1} parent=1 // pred_check
      _
    $region43: #{_nn_forward_impl.1} parent=1 // pred_check_branch
      %336 = sbr.rel (0) target = $region45
    $region44: #{_nn_forward_impl.1} parent=1 // pred_region
      _
    $region45: #{_nn_forward_impl.1} parent=1 // pred_fallthru
      _
    // Predicated region
    $region46: #{_nn_forward_impl.1} parent=1 // pred_check
      _
    $region47: #{_nn_forward_impl.1} parent=1 // pred_check_branch
      %338 = sbr.rel (0) target = $region49
    $region48: #{_nn_forward_impl.1} parent=1 // pred_region
      _
    $region49: #{_nn_forward_impl.1} parent=1 // pred_fallthru
      _
    %339 = vsyncpa [#allocation3], 1
    %340 = vsyncpa [#allocation5], 1

</llo_original>
